<compile_context>
chip_gen: v7x
topology: tpu7x:2x2x1
jax: 0.10.0
libtpu: 0.0.40
codegen_flags: <defaults>
</compile_context>

<pallas_src>
import functools

import jax
import jax.numpy as jnp
from jax.experimental import pallas as pl
from jax.experimental.pallas import tpu as pltpu


def _round_up(v, m):
    return ((v + m - 1) // m) * m


def _tpu_budgets():
    """Generation-aware (vmem_limit_bytes, per-buffer x-tile byte budget)."""
    vmem_phys = 128 << 20
    try:
        vmem_phys = int(pltpu.get_tpu_info().vmem_capacity_bytes)
    except Exception:
        pass
    if vmem_phys <= (64 << 20):
        # v7x-class TensorCore: 64 MiB physical VMEM, ~1.6 TB/s per-TC HBM.
        # Use ~2x the v6e tile bytes to keep per-step DMA in the 2-6 us band,
        # while the scoped limit stays well under physical VMEM.
        return 48 << 20, 12 << 20
    # v5e / v6e: 128 MiB physical VMEM; ~6 MiB tiles already reach the HBM roofline.
    return 64 << 20, 6 << 20


def _pick_tm(M, H, itemsize, x_tile_budget):
    """Rows per tile: byte-budget based, clamped to the problem size."""
    sub = 8 * max(1, 4 // max(1, itemsize))          # sublane granule: f32 8, bf16 16, int8 32
    tm = x_tile_budget // max(1, H * itemsize)       # rows per ~budget-sized x tile
    tm = max(sub, min(tm, 32768))
    tm = min(tm, _round_up(M, sub))                  # don't over-allocate for small problems
    if tm >= 256:
        tm = (tm // 256) * 256                       # lane/sublane friendly
    else:
        tm = _round_up(tm, sub)
    return tm


def _make_kernel(lane_major_out):
    def kernel(x_ref, w_ref, b_ref, o_ref):
        # x_ref: [TM, H] activations (native dtype), w_ref: [1, H] f32 (VMEM-resident),
        # b_ref: [1, 1] f32 (SMEM scalar), o_ref: [1, TM] (lane-major) or [TM, 1].
        x = x_ref[...].astype(jnp.float32)
        w = w_ref[...].astype(jnp.float32)
        # Linear(H -> 1): VPU multiply + XLU lane-axis reduce; no MXU needed since
        # the kernel is HBM-bound and this hides entirely under the x DMA.
        h = jnp.sum(x * w, axis=-1, keepdims=True) + b_ref[0, 0]     # [TM, 1]
        s = jax.nn.sigmoid(h)
        if lane_major_out:
            s = jnp.transpose(s)                                     # [1, TM] via XLU
        o_ref[...] = s.astype(o_ref.dtype)
    return kernel


@functools.lru_cache(maxsize=None)
def _build_call(H, TM, num_tiles, lane_major, vmem_limit):
    if lane_major:
        out_shape = jax.ShapeDtypeStruct((num_tiles, TM), jnp.float32)
        out_spec = pl.BlockSpec((1, TM), lambda i: (i, 0))           # lane-dense stores
    else:
        out_shape = jax.ShapeDtypeStruct((num_tiles * TM, 1), jnp.float32)
        out_spec = pl.BlockSpec((TM, 1), lambda i: (i, 0))           # fallback layout
    return pl.pallas_call(
        _make_kernel(lane_major),
        out_shape=out_shape,
        grid=(num_tiles,),
        in_specs=[
            pl.BlockSpec((TM, H), lambda i: (i, 0)),                 # x tiles (double-buffered)
            pl.BlockSpec((1, H), lambda i: (0, 0)),                  # weight, VMEM-resident
            pl.BlockSpec(memory_space=pltpu.MemorySpace.SMEM),       # bias scalar in SMEM
        ],
        out_specs=out_spec,
        compiler_params=pltpu.CompilerParams(
            dimension_semantics=("parallel",),   # shard M tiles across TCs (v7x megacore)
            vmem_limit_bytes=vmem_limit,
        ),
    )


_LANE_MAJOR_OK = True   # flipped off once if the lane-dense store fails to lower


def classifier_forward(x, mask_cls, weight, bias):
    """x: [B, N, H] (f32 or bf16 - pass bf16 straight through, the kernel casts),
    mask_cls: [B, N] (bool/int/float), weight: [1, H], bias: [1].
    Returns sent_scores: [B, N] float32."""
    global _LANE_MAJOR_OK
    B, N, H = x.shape
    M = B * N

    vmem_limit, x_budget = _tpu_budgets()
    TM = _pick_tm(M, H, x.dtype.itemsize, x_budget)
    num_tiles = (M + TM - 1) // TM

    x2 = x.reshape(M, H)                                  # free reshape, native dtype
    w2 = weight.reshape(1, H).astype(jnp.float32)
    b2 = bias.reshape(1, 1).astype(jnp.float32)

    out = None
    if _LANE_MAJOR_OK:
        try:
            # Preferred path: lane-dense (1, TM) output blocks.
            # (Capability probe only works eagerly; under an outer jit the
            #  lane-major path is assumed supported.)
            out = _build_call(H, TM, num_tiles, True, vmem_limit)(x2, w2, b2)
        except Exception:
            _LANE_MAJOR_OK = False                        # compiler lacks the relayout
    if out is None:
        out = _build_call(H, TM, num_tiles, False, vmem_limit)(x2, w2, b2)

    scores = out.reshape(-1)[:M].reshape(B, N)
    # Mask multiply on the tiny [B, N] result keeps the kernel streaming only x.
    return scores * mask_cls.astype(jnp.float32)


def _reference(x, mask_cls, weight, bias):
    # Pure-JAX reference with the same math (f32 elementwise mul + sum, no MXU),
    # so it matches the kernel bit-for-bit up to reduction order.
    xf = x.astype(jnp.float32)
    h = jnp.sum(xf * weight.reshape(-1).astype(jnp.float32), axis=-1) + bias.astype(jnp.float32)[0]
    return jax.nn.sigmoid(h) * mask_cls.astype(jnp.float32)


if __name__ == "__main__":
    key = jax.random.PRNGKey(0)

    # --- Small case consistent with the module: batch=2, num_sentences=8, hidden=32
    B, N, H = 2, 8, 32
    kx, kw, kb, km, key = jax.random.split(key, 5)
    x = jax.random.normal(kx, (B, N, H), dtype=jnp.float32)
    bound = 1.0 / (H ** 0.5)                     # nn.Linear-style init range
    weight = jax.random.uniform(kw, (1, H), minval=-bound, maxval=bound, dtype=jnp.float32)
    bias = jax.random.uniform(kb, (1,), minval=-bound, maxval=bound, dtype=jnp.float32)
    mask_cls = (jax.random.uniform(km, (B, N)) > 0.3).astype(jnp.int32)

    sent_scores = classifier_forward(x, mask_cls, weight, bias)
    sent_scores = jax.block_until_ready(sent_scores)
    ref = _reference(x, mask_cls, weight, bias)
    assert sent_scores.shape == (B, N)
    assert jnp.allclose(sent_scores, ref, atol=1e-5, rtol=1e-5)

    # --- Second case: multi-tile grid with a ragged final block, bf16 activations
    B2, N2, H2 = 7, 100, 1024
    kx, kw, kb, km, key = jax.random.split(key, 5)
    x2 = jax.random.normal(kx, (B2, N2, H2), dtype=jnp.float32).astype(jnp.bfloat16)
    bound2 = 1.0 / (H2 ** 0.5)
    weight2 = jax.random.uniform(kw, (1, H2), minval=-bound2, maxval=bound2, dtype=jnp.float32)
    bias2 = jax.random.uniform(kb, (1,), minval=-bound2, maxval=bound2, dtype=jnp.float32)
    mask2 = (jax.random.uniform(km, (B2, N2)) > 0.5).astype(jnp.float32)

    scores2 = classifier_forward(x2, mask2, weight2, bias2)
    scores2 = jax.block_until_ready(scores2)
    ref2 = _reference(x2, mask2, weight2, bias2)
    assert scores2.shape == (B2, N2)
    assert jnp.allclose(scores2, ref2, atol=1e-4, rtol=1e-4)

    print("KERNEL_OK")
</pallas_src>

<mosaic_0001>
module attributes {stable_mosaic.version = 11 : i64} {
  func.func @kernel(%arg0: i32, %arg1: memref<16x32xf32, #tpu.memory_space<vmem>>, %arg2: memref<1x32xf32, #tpu.memory_space<vmem>>, %arg3: memref<1x1xf32, #tpu.memory_space<smem>>, %arg4: memref<1x16xf32, #tpu.memory_space<vmem>>) attributes {dimension_semantics = [#tpu.dimension_semantics<parallel>], iteration_bounds = array<i64: 1>, scalar_prefetch = 0 : i64, scratch_operands = 0 : i64, tpu.core_type = #tpu.core_type<tc>, window_params = [{transform_indices = @transform_0, window_bounds = array<i64: 16, 32>}, {pipeline_mode = #tpu.pipeline_mode<synchronous>, transform_indices = @transform_1, window_bounds = array<i64: 1, 32>}, {transform_indices = @transform_2, window_bounds = array<i64: 1, 1>}, {transform_indices = @transform_3, window_bounds = array<i64: 1, 16>}]} {
    %c0 = arith.constant 0 : index
    %c0_0 = arith.constant 0 : index
    %0 = vector.load %arg1[%c0, %c0_0] : memref<16x32xf32, #tpu.memory_space<vmem>>, vector<16x32xf32>
    %c0_1 = arith.constant 0 : index
    %c0_2 = arith.constant 0 : index
    %1 = vector.load %arg2[%c0_1, %c0_2] : memref<1x32xf32, #tpu.memory_space<vmem>>, vector<1x32xf32>
    %2 = vector.broadcast %1 : vector<1x32xf32> to vector<16x32xf32>
    %3 = arith.mulf %0, %2 : vector<16x32xf32>
    %cst = arith.constant dense<0.000000e+00> : vector<16xf32>
    %4 = vector.multi_reduction <add>, %3, %cst [1] : vector<16x32xf32> to vector<16xf32>
    %5 = vector.shape_cast %4 : vector<16xf32> to vector<16x1xf32>
    %c0_3 = arith.constant 0 : index
    %c0_4 = arith.constant 0 : index
    %6 = memref.load %arg3[%c0_3, %c0_4] : memref<1x1xf32, #tpu.memory_space<smem>>
    %7 = vector.broadcast %6 : f32 to vector<16x1xf32>
    %8 = arith.addf %5, %7 : vector<16x1xf32>
    %9 = arith.negf %8 : vector<16x1xf32>
    %10 = math.exp %9 : vector<16x1xf32>
    %cst_5 = arith.constant 1.000000e+00 : f32
    %11 = vector.broadcast %cst_5 : f32 to vector<16x1xf32>
    %12 = arith.addf %11, %10 : vector<16x1xf32>
    %13 = arith.divf %11, %12 : vector<16x1xf32>
    %14 = tpu.transpose %13, [1, 0] : vector<16x1xf32> -> vector<1x16xf32>
    %c0_6 = arith.constant 0 : index
    %c0_7 = arith.constant 0 : index
    %15 = vector.load %arg4[%c0_6, %c0_7] : memref<1x16xf32, #tpu.memory_space<vmem>>, vector<1x16xf32>
    tpu.vector_store %arg4[%c0_6, %c0_7], %14 {strides = array<i32>} : memref<1x16xf32, #tpu.memory_space<vmem>>, vector<1x16xf32>,
    return
  }
  func.func @transform_0(%arg0: i32) -> (i32, i32) {
    %c0_i32 = arith.constant 0 : i32
    %c0_i32_0 = arith.constant 0 : i32
    return %arg0, %c0_i32 : i32, i32
  }
  func.func @transform_1(%arg0: i32) -> (i32, i32) {
    %c0_i32 = arith.constant 0 : i32
    %c0_i32_0 = arith.constant 0 : i32
    %c0_i32_1 = arith.constant 0 : i32
    return %c0_i32, %c0_i32_0 : i32, i32
  }
  func.func @transform_2(%arg0: i32) -> (i32, i32) {
    %c0_i32 = arith.constant 0 : i32
    %c0_i32_0 = arith.constant 0 : i32
    %c0_i32_1 = arith.constant 0 : i32
    return %c0_i32, %c0_i32_0 : i32, i32
  }
  func.func @transform_3(%arg0: i32) -> (i32, i32) {
    %c0_i32 = arith.constant 0 : i32
    %c0_i32_0 = arith.constant 0 : i32
    return %arg0, %c0_i32 : i32, i32
  }
}

module attributes {stable_mosaic.version = 11 : i64} {
  func.func @kernel(%arg0: i32, %arg1: memref<16x32xf32, #tpu.memory_space<vmem>>, %arg2: memref<1x32xf32, #tpu.memory_space<vmem>>, %arg3: memref<1x1xf32, #tpu.memory_space<smem>>, %arg4: memref<16x1xf32, #tpu.memory_space<vmem>>) attributes {dimension_semantics = [#tpu.dimension_semantics<parallel>], iteration_bounds = array<i64: 1>, scalar_prefetch = 0 : i64, scratch_operands = 0 : i64, tpu.core_type = #tpu.core_type<tc>, window_params = [{transform_indices = @transform_0, window_bounds = array<i64: 16, 32>}, {pipeline_mode = #tpu.pipeline_mode<synchronous>, transform_indices = @transform_1, window_bounds = array<i64: 1, 32>}, {transform_indices = @transform_2, window_bounds = array<i64: 1, 1>}, {transform_indices = @transform_3, window_bounds = array<i64: 16, 1>}]} {
    %c0 = arith.constant 0 : index
    %c0_0 = arith.constant 0 : index
    %0 = vector.load %arg1[%c0, %c0_0] : memref<16x32xf32, #tpu.memory_space<vmem>>, vector<16x32xf32>
    %c0_1 = arith.constant 0 : index
    %c0_2 = arith.constant 0 : index
    %1 = vector.load %arg2[%c0_1, %c0_2] : memref<1x32xf32, #tpu.memory_space<vmem>>, vector<1x32xf32>
    %2 = vector.broadcast %1 : vector<1x32xf32> to vector<16x32xf32>
    %3 = arith.mulf %0, %2 : vector<16x32xf32>
    %cst = arith.constant dense<0.000000e+00> : vector<16xf32>
    %4 = vector.multi_reduction <add>, %3, %cst [1] : vector<16x32xf32> to vector<16xf32>
    %5 = vector.shape_cast %4 : vector<16xf32> to vector<16x1xf32>
    %c0_3 = arith.constant 0 : index
    %c0_4 = arith.constant 0 : index
    %6 = memref.load %arg3[%c0_3, %c0_4] : memref<1x1xf32, #tpu.memory_space<smem>>
    %7 = vector.broadcast %6 : f32 to vector<16x1xf32>
    %8 = arith.addf %5, %7 : vector<16x1xf32>
    %9 = arith.negf %8 : vector<16x1xf32>
    %10 = math.exp %9 : vector<16x1xf32>
    %cst_5 = arith.constant 1.000000e+00 : f32
    %11 = vector.broadcast %cst_5 : f32 to vector<16x1xf32>
    %12 = arith.addf %11, %10 : vector<16x1xf32>
    %13 = arith.divf %11, %12 : vector<16x1xf32>
    %c0_6 = arith.constant 0 : index
    %c0_7 = arith.constant 0 : index
    %14 = vector.load %arg4[%c0_6, %c0_7] : memref<16x1xf32, #tpu.memory_space<vmem>>, vector<16x1xf32>
    tpu.vector_store %arg4[%c0_6, %c0_7], %13 {strides = array<i32>} : memref<16x1xf32, #tpu.memory_space<vmem>>, vector<16x1xf32>,
    return
  }
  func.func @transform_0(%arg0: i32) -> (i32, i32) {
    %c0_i32 = arith.constant 0 : i32
    %c0_i32_0 = arith.constant 0 : i32
    return %arg0, %c0_i32 : i32, i32
  }
  func.func @transform_1(%arg0: i32) -> (i32, i32) {
    %c0_i32 = arith.constant 0 : i32
    %c0_i32_0 = arith.constant 0 : i32
    %c0_i32_1 = arith.constant 0 : i32
    return %c0_i32, %c0_i32_0 : i32, i32
  }
  func.func @transform_2(%arg0: i32) -> (i32, i32) {
    %c0_i32 = arith.constant 0 : i32
    %c0_i32_0 = arith.constant 0 : i32
    %c0_i32_1 = arith.constant 0 : i32
    return %c0_i32, %c0_i32_0 : i32, i32
  }
  func.func @transform_3(%arg0: i32) -> (i32, i32) {
    %c0_i32 = arith.constant 0 : i32
    %c0_i32_0 = arith.constant 0 : i32
    return %arg0, %c0_i32 : i32, i32
  }
}

</mosaic_0001>

<llo_original>
// kernel: tpu_custom_call.1
$region0: #{tpu_custom_call.1}
  #allocation0 [shape = 'u32[]', space=smem, size = 0x4, offset = 0x4, fixed_abs, tag = 'smem constant byte address 0x4 - core index']
  #allocation1 [shape = 'u32[144,128]{1,0:T(1,128)}', space=vmem, size = 0x12000, scoped, tag = 'internal scratch']
  #allocation2 [shape = 'f32[1,1]{1,0:T(1,128)S(6)}', space=smem, size = 0x200, scoped, tag = 'scoped memory for tpu_custom_call.1']
  %s0 = inlined_call_operand.hbm [shape: f32[16,32], index: 0, kind: input, shape index: {}]
  %s1 = inlined_call_operand.hbm [shape: f32[1,32], index: 1, kind: input, shape index: {}]
  %s2 = inlined_call_operand.<no memory space> [shape: f32[1,1], index: 2, kind: input, shape index: {}]
  %s3 = inlined_call_operand.hbm [shape: f32[1,16], index: 3, kind: output, shape index: {}]
  %s4 = sld [smem:[#allocation0]]
  $region30: #{tpu_custom_call.1} parent=0
    _
  %s6 = ssub.s32 1, %s4
  %s7 = scalar_select 0, %s6, %s4
  %8 = sst [smem:[#allocation2]] %s2
  $region1: #{tpu_custom_call.1} parent=0
    #allocation3 [shape = 'u8[8192]{0}', space=vmem, size = 0x2000, scoped, tag = 'input window, operand 0, single buffered']
    #allocation4 [shape = 's32[1]{0}', space=sflag, size = 0x4, scoped, tag = 'scoped memory for tpu_custom_call.1']
    #allocation5 [shape = 's32[1]{0}', space=sflag, size = 0x4, scoped, tag = 'scoped memory for tpu_custom_call.1']
    #allocation6 [shape = 'u8[512]{0}', space=vmem, size = 0x400, scoped, tag = 'input window, operand 1, single buffered']
    #allocation7 [shape = 's32[1]{0}', space=sflag, size = 0x4, scoped, tag = 'scoped memory for tpu_custom_call.1']
    #allocation8 [shape = 'u8[512]{0}', space=vmem, size = 0x400, scoped, tag = 'output window, operand 0, single buffered']
    %9 = vsyncpa [#allocation4], 0
    %10 = vsyncpa [#allocation7], 0
    %11 = vsyncpa [#allocation5], 0
    // Predicated region
    $region2: #{tpu_custom_call.1} parent=1 // pred_check
      _
    $region3: #{tpu_custom_call.1} parent=1 // pred_check_branch
      %13 = sbr.rel (0) target = $region5
    $region4: #{tpu_custom_call.1} parent=1 // pred_region
      %s15 = ssub.s32 256, 256
      %16 = vsyncadd [#allocation4], %s15
      %s17 = sshll.u32 [#allocation3], 4
      %s18 = int_to_ptr.vmem [resolvable:$true] %s17
      %23 = dma.hbm_to_vmem [thread:$0]  %s0, 256, %s18, [#allocation4], 128, 128, 8
    $region5: #{tpu_custom_call.1} parent=1 // pred_fallthru
      _
    // Predicated region
    $region6: #{tpu_custom_call.1} parent=1 // pred_check
      _
    $region7: #{tpu_custom_call.1} parent=1 // pred_check_branch
      %25 = sbr.rel (0) target = $region9
    $region8: #{tpu_custom_call.1} parent=1 // pred_region
      %s27 = ssub.s32 16, 16
      %28 = vsyncadd [#allocation7], %s27
      %s30 = sshll.u32 [#allocation6], 4
      %s31 = int_to_ptr.vmem [resolvable:$true] %s30
      %33 = dma.hbm_to_vmem [thread:$0]  %s1, 16, %s31, [#allocation7]
    $region9: #{tpu_custom_call.1} parent=1 // pred_fallthru
      _
    // Predicated region
    $region10: #{tpu_custom_call.1} parent=1 // pred_check
      _
    $region11: #{tpu_custom_call.1} parent=1 // pred_check_branch
      %35 = sbr.rel (0) target = $region13
    $region12: #{tpu_custom_call.1} parent=1 // pred_region
      _
    $region13: #{tpu_custom_call.1} parent=1 // pred_fallthru
      _
    // Predicated region
    $region14: #{tpu_custom_call.1} parent=1 // pred_check
      _
    $region15: #{tpu_custom_call.1} parent=1 // pred_check_branch
      %37 = sbr.rel (0) target = $region17
    $region16: #{tpu_custom_call.1} parent=1 // pred_region
      %38 = dma.done [#allocation4], 256
    $region17: #{tpu_custom_call.1} parent=1 // pred_fallthru
      _
    // Predicated region
    $region18: #{tpu_custom_call.1} parent=1 // pred_check
      _
    $region19: #{tpu_custom_call.1} parent=1 // pred_check_branch
      %40 = sbr.rel (0) target = $region21
    $region20: #{tpu_custom_call.1} parent=1 // pred_region
      %41 = dma.done [#allocation7], 16
    $region21: #{tpu_custom_call.1} parent=1 // pred_fallthru
      _
    %v42 = vld [vmem:[#allocation3] sm:$0xff]
    %v43 = vld [vmem:[#allocation3 + $0x8] sm:$0xff]
    %v44 = vld [vmem:[#allocation6] sm:$0x1]
    %v46 = vlaneseq
    %v47 = vshrl.u32 %v46, 7
    %v48 = vsub.s32 0, %v47
    %v49 = vrot.slane %v44, %v48
    %v51 = vmul.f32 %v42, %v49
    %v52 = vmul.f32 %v43, %v49
    %vm53 = vcmask 261120
    %v54 = vsel %vm53, %v51, 0.0
    %55 = vadd.xlane.f32.xlu0 %v54
    %v56 = vpop.xlane.xlu0 %55
    %v57 = vsel %vm53, %v52, 0.0
    %58 = vadd.xlane.f32.xlu0 %v57
    %v59 = vpop.xlane.xlu0 %58
    %s60 = sld [smem:[#allocation2]]
    %v61 = vstv %s60
    %v62 = vadd.f32 %v56, %v61
    %v63 = vadd.f32 %v59, %v61
    %v64 = vxor.u32 %v62, 2147483648
    %v65 = vxor.u32 %v63, 2147483648
    %v66 = vmul.f32 %v64, 1.442695
    %v67 = vpow.pop %v66
    %v68 = vmul.f32 %v65, 1.442695
    %v69 = vpow.pop %v68
    %v70 = vadd.f32 %v67, 1.0
    %v71 = vadd.f32 %v69, 1.0
    %v72 = vrcp.pop %v70
    %v73 = vmul.f32 1.0, %v72
    %v74 = vrcp.pop %v71
    %v75 = vmul.f32 1.0, %v74
    %76 = vxpose.xlu0.b32.start [1/16] %v73, 128
    %77 = vxpose.xlu0.b32.cont [2/16] %v75, 128
    %78 = vxpose.xlu0.b32.cont [3/16] 0.0, 128
    %79 = vxpose.xlu0.b32.cont [4/16] 0.0, 128
    %80 = vxpose.xlu0.b32.cont [5/16] 0.0, 128
    %81 = vxpose.xlu0.b32.cont [6/16] 0.0, 128
    %82 = vxpose.xlu0.b32.cont [7/16] 0.0, 128
    %83 = vxpose.xlu0.b32.cont [8/16] 0.0, 128
    %84 = vxpose.xlu0.b32.cont [9/16] 0.0, 128
    %85 = vxpose.xlu0.b32.cont [10/16] 0.0, 128
    %86 = vxpose.xlu0.b32.cont [11/16] 0.0, 128
    %87 = vxpose.xlu0.b32.cont [12/16] 0.0, 128
    %88 = vxpose.xlu0.b32.cont [13/16] 0.0, 128
    %89 = vxpose.xlu0.b32.cont [14/16] 0.0, 128
    %90 = vxpose.xlu0.b32.cont [15/16] 0.0, 128
    %91 = vxpose.xlu0.b32.end [16/16] 0.0, 128
    %v92 = vpop.trf.xlu0
    %v93 = vpop.trf.xlu0
    %v94 = vpop.trf.xlu0
    %v95 = vpop.trf.xlu0
    %v96 = vpop.trf.xlu0
    %v97 = vpop.trf.xlu0
    %v98 = vpop.trf.xlu0
    %v99 = vpop.trf.xlu0
    %v100 = vpop.trf.xlu0
    %v101 = vpop.trf.xlu0
    %v102 = vpop.trf.xlu0
    %v103 = vpop.trf.xlu0
    %v104 = vpop.trf.xlu0
    %v105 = vpop.trf.xlu0
    %v106 = vpop.trf.xlu0
    %v107 = vpop.trf.xlu0
    %vm108 = vcmask 122880
    %109 = vst.msk [vmem:[#allocation8] sm:$0x1] %vm108, %v92
    // Predicated region
    $region22: #{tpu_custom_call.1} parent=1 // pred_check
      _
    $region23: #{tpu_custom_call.1} parent=1 // pred_check_branch
      %111 = sbr.rel (0) target = $region25
    $region24: #{tpu_custom_call.1} parent=1 // pred_region
      %s113 = ssub.s32 16, 16
      %114 = vsyncadd [#allocation5], %s113
      %s116 = sshll.u32 [#allocation8], 4
      %s117 = int_to_ptr.vmem [resolvable:$true] %s116
      %119 = dma.vmem_to_hbm [thread:$0]  %s117, 16, %s3, [#allocation5]
    $region25: #{tpu_custom_call.1} parent=1 // pred_fallthru
      _
    // Predicated region
    $region26: #{tpu_custom_call.1} parent=1 // pred_check
      _
    $region27: #{tpu_custom_call.1} parent=1 // pred_check_branch
      %121 = sbr.rel (0) target = $region29
    $region28: #{tpu_custom_call.1} parent=1 // pred_region
      %122 = dma.done [#allocation5], 16
    $region29: #{tpu_custom_call.1} parent=1 // pred_fallthru
      _
    %123 = vsyncpa [#allocation4], 1
    %124 = vsyncpa [#allocation7], 1
    %125 = vsyncpa [#allocation5], 1

// kernel: tpu_custom_call.1
$region0: #{tpu_custom_call.1}
  #allocation0 [shape = 'u32[]', space=smem, size = 0x4, offset = 0x4, fixed_abs, tag = 'smem constant byte address 0x4 - core index']
  #allocation1 [shape = 'u32[144,128]{1,0:T(1,128)}', space=vmem, size = 0x12000, scoped, tag = 'internal scratch']
  #allocation2 [shape = 'f32[1,1]{1,0:T(1,128)S(6)}', space=smem, size = 0x200, scoped, tag = 'scoped memory for tpu_custom_call.1']
  %s0 = inlined_call_operand.hbm [shape: f32[16,32], index: 0, kind: input, shape index: {}]
  %s1 = inlined_call_operand.hbm [shape: f32[1,32], index: 1, kind: input, shape index: {}]
  %s2 = inlined_call_operand.<no memory space> [shape: f32[1,1], index: 2, kind: input, shape index: {}]
  %s3 = inlined_call_operand.hbm [shape: f32[16,1], index: 3, kind: output, shape index: {}]
  %s4 = sld [smem:[#allocation0]]
  $region30: #{tpu_custom_call.1} parent=0
    _
  %s6 = ssub.s32 1, %s4
  %s7 = scalar_select 0, %s6, %s4
  %8 = sst [smem:[#allocation2]] %s2
  $region1: #{tpu_custom_call.1} parent=0
    #allocation3 [shape = 'u8[8192]{0}', space=vmem, size = 0x2000, scoped, tag = 'input window, operand 0, single buffered']
    #allocation4 [shape = 's32[1]{0}', space=sflag, size = 0x4, scoped, tag = 'scoped memory for tpu_custom_call.1']
    #allocation5 [shape = 's32[1]{0}', space=sflag, size = 0x4, scoped, tag = 'scoped memory for tpu_custom_call.1']
    #allocation6 [shape = 'u8[512]{0}', space=vmem, size = 0x400, scoped, tag = 'input window, operand 1, single buffered']
    #allocation7 [shape = 's32[1]{0}', space=sflag, size = 0x4, scoped, tag = 'scoped memory for tpu_custom_call.1']
    #allocation8 [shape = 'u8[8192]{0}', space=vmem, size = 0x2000, scoped, tag = 'output window, operand 0, single buffered']
    %9 = vsyncpa [#allocation4], 0
    %10 = vsyncpa [#allocation7], 0
    %11 = vsyncpa [#allocation5], 0
    // Predicated region
    $region2: #{tpu_custom_call.1} parent=1 // pred_check
      _
    $region3: #{tpu_custom_call.1} parent=1 // pred_check_branch
      %13 = sbr.rel (0) target = $region5
    $region4: #{tpu_custom_call.1} parent=1 // pred_region
      %s15 = ssub.s32 256, 256
      %16 = vsyncadd [#allocation4], %s15
      %s17 = sshll.u32 [#allocation3], 4
      %s18 = int_to_ptr.vmem [resolvable:$true] %s17
      %23 = dma.hbm_to_vmem [thread:$0]  %s0, 256, %s18, [#allocation4], 128, 128, 8
    $region5: #{tpu_custom_call.1} parent=1 // pred_fallthru
      _
    // Predicated region
    $region6: #{tpu_custom_call.1} parent=1 // pred_check
      _
    $region7: #{tpu_custom_call.1} parent=1 // pred_check_branch
      %25 = sbr.rel (0) target = $region9
    $region8: #{tpu_custom_call.1} parent=1 // pred_region
      %s27 = ssub.s32 16, 16
      %28 = vsyncadd [#allocation7], %s27
      %s30 = sshll.u32 [#allocation6], 4
      %s31 = int_to_ptr.vmem [resolvable:$true] %s30
      %33 = dma.hbm_to_vmem [thread:$0]  %s1, 16, %s31, [#allocation7]
    $region9: #{tpu_custom_call.1} parent=1 // pred_fallthru
      _
    // Predicated region
    $region10: #{tpu_custom_call.1} parent=1 // pred_check
      _
    $region11: #{tpu_custom_call.1} parent=1 // pred_check_branch
      %35 = sbr.rel (0) target = $region13
    $region12: #{tpu_custom_call.1} parent=1 // pred_region
      _
    $region13: #{tpu_custom_call.1} parent=1 // pred_fallthru
      _
    // Predicated region
    $region14: #{tpu_custom_call.1} parent=1 // pred_check
      _
    $region15: #{tpu_custom_call.1} parent=1 // pred_check_branch
      %37 = sbr.rel (0) target = $region17
    $region16: #{tpu_custom_call.1} parent=1 // pred_region
      %38 = dma.done [#allocation4], 256
    $region17: #{tpu_custom_call.1} parent=1 // pred_fallthru
      _
    // Predicated region
    $region18: #{tpu_custom_call.1} parent=1 // pred_check
      _
    $region19: #{tpu_custom_call.1} parent=1 // pred_check_branch
      %40 = sbr.rel (0) target = $region21
    $region20: #{tpu_custom_call.1} parent=1 // pred_region
      %41 = dma.done [#allocation7], 16
    $region21: #{tpu_custom_call.1} parent=1 // pred_fallthru
      _
    %v42 = vld [vmem:[#allocation3] sm:$0xff]
    %v43 = vld [vmem:[#allocation3 + $0x8] sm:$0xff]
    %v44 = vld [vmem:[#allocation6] sm:$0x1]
    %v46 = vlaneseq
    %v47 = vshrl.u32 %v46, 7
    %v48 = vsub.s32 0, %v47
    %v49 = vrot.slane %v44, %v48
    %v51 = vmul.f32 %v42, %v49
    %v52 = vmul.f32 %v43, %v49
    %vm53 = vcmask 261120
    %v54 = vsel %vm53, %v51, 0.0
    %55 = vadd.xlane.f32.xlu0 %v54
    %v56 = vpop.xlane.xlu0 %55
    %v57 = vsel %vm53, %v52, 0.0
    %58 = vadd.xlane.f32.xlu0 %v57
    %v59 = vpop.xlane.xlu0 %58
    %s60 = sld [smem:[#allocation2]]
    %v61 = vstv %s60
    %v62 = vadd.f32 %v56, %v61
    %v63 = vadd.f32 %v59, %v61
    %v64 = vxor.u32 %v62, 2147483648
    %v65 = vxor.u32 %v63, 2147483648
    %v66 = vmul.f32 %v64, 1.442695
    %v67 = vpow.pop %v66
    %v68 = vmul.f32 %v65, 1.442695
    %v69 = vpow.pop %v68
    %v70 = vadd.f32 %v67, 1.0
    %v71 = vadd.f32 %v69, 1.0
    %v72 = vrcp.pop %v70
    %v73 = vmul.f32 1.0, %v72
    %v74 = vrcp.pop %v71
    %v75 = vmul.f32 1.0, %v74
    %vm76 = vcmask 7168
    %77 = vst.msk [vmem:[#allocation8] sm:$0xff] %vm76, %v73
    %78 = vst.msk [vmem:[#allocation8 + $0x8] sm:$0xff] %vm76, %v75
    // Predicated region
    $region22: #{tpu_custom_call.1} parent=1 // pred_check
      _
    $region23: #{tpu_custom_call.1} parent=1 // pred_check_branch
      %80 = sbr.rel (0) target = $region25
    $region24: #{tpu_custom_call.1} parent=1 // pred_region
      %s82 = ssub.s32 256, 256
      %83 = vsyncadd [#allocation5], %s82
      %s84 = sshll.u32 [#allocation8], 4
      %s85 = int_to_ptr.vmem [resolvable:$true] %s84
      %90 = dma.vmem_to_hbm [thread:$0]  %s85, 256, %s3, [#allocation5], 128, 128, 8
    $region25: #{tpu_custom_call.1} parent=1 // pred_fallthru
      _
    // Predicated region
    $region26: #{tpu_custom_call.1} parent=1 // pred_check
      _
    $region27: #{tpu_custom_call.1} parent=1 // pred_check_branch
      %92 = sbr.rel (0) target = $region29
    $region28: #{tpu_custom_call.1} parent=1 // pred_region
      %93 = dma.done [#allocation5], 256
    $region29: #{tpu_custom_call.1} parent=1 // pred_fallthru
      _
    %94 = vsyncpa [#allocation4], 1
    %95 = vsyncpa [#allocation7], 1
    %96 = vsyncpa [#allocation5], 1

</llo_original>
